<compile_context>
chip_gen: v6e
topology: v6e:2x2x1
jax: 0.10.0
libtpu: 0.0.40
codegen_flags: <defaults>
</compile_context>

<pallas_src>
import functools

import jax
import jax.numpy as jnp
from jax.experimental import pallas as pl
from jax.experimental.pallas import tpu as pltpu

C_IN = 12
C_OUT = 12
KH = KW = 3
N_BRANCH = 4


def _fused_conv_kernel(x_ref, w_ref, b_ref, o_ref, *, img_w, n_cols):
    # x_ref: (C_IN, N)        one branch, flattened as n = b*H*W + h*W + w
    # w_ref: (C_OUT, C_IN*9)  tap-major im2col weights
    # b_ref: (C_OUT, 1)
    # o_ref: (C_OUT, N)
    x = x_ref[...].astype(jnp.float32)

    # Build the (C_IN*9, N) im2col patch matrix with lane rotations:
    # tap (kh, kw) needs x[c, n + kh*W + kw]; a left-shift by `off` is
    # roll(x, n_cols - off) (jnp.roll semantics: out[n] = x[(n + off) % N]).
    taps = []
    for kh in range(KH):
        for kw in range(KW):
            off = kh * img_w + kw
            if off == 0:
                taps.append(x)
            else:
                taps.append(pltpu.roll(x, n_cols - off, axis=1))
    patches = jnp.concatenate(taps, axis=0)               # (KH*KW*C_IN, N)

    # One MXU pass: (C_OUT, 108) @ (108, N).
    acc = jnp.dot(w_ref[...].astype(jnp.float32), patches,
                  preferred_element_type=jnp.float32)      # (C_OUT, N)
    acc = acc + b_ref[...].astype(jnp.float32)             # bias broadcast
    o_ref[...] = acc.astype(o_ref.dtype)


def fused_conv2d_valid(xs, ws, bs):
    """xs: (4, B, C_IN, H, W), ws: (4, C_OUT, C_IN, 3, 3), bs: (4, C_OUT)
    -> (4, B, C_OUT, H-2, W-2): per-branch valid 3x3 convolution."""
    nb, B, C, H, W = xs.shape
    assert nb == N_BRANCH and C == C_IN
    oh, ow = H - KH + 1, W - KW + 1
    n_cols = B * H * W

    # Host-side layout plumbing (free): channel-major flattened inputs,
    # tap-major (kh, kw, c) flattened weights, 2-D bias.
    x_flat = jnp.transpose(xs, (0, 2, 1, 3, 4)).reshape(nb, C_IN, n_cols)
    w_flat = jnp.transpose(ws, (0, 1, 3, 4, 2)).reshape(nb, C_OUT, KH * KW * C_IN)
    b_2d = bs.reshape(nb, C_OUT, 1)

    kernel = functools.partial(_fused_conv_kernel, img_w=W, n_cols=n_cols)

    out = pl.pallas_call(
        kernel,
        out_shape=jax.ShapeDtypeStruct((nb, C_OUT, n_cols), xs.dtype),
        grid_spec=pltpu.PrefetchScalarGridSpec(
            num_scalar_prefetch=0,
            grid=(nb,),
            in_specs=[
                pl.BlockSpec((pl.Squeezed(), C_IN, n_cols), lambda i: (i, 0, 0)),
                pl.BlockSpec((pl.Squeezed(), C_OUT, KH * KW * C_IN),
                             lambda i: (i, 0, 0)),
                pl.BlockSpec((pl.Squeezed(), C_OUT, 1), lambda i: (i, 0, 0)),
            ],
            out_specs=pl.BlockSpec((pl.Squeezed(), C_OUT, n_cols),
                                   lambda i: (i, 0, 0)),
        ),
        compiler_params=pltpu.CompilerParams(dimension_semantics=("parallel",)),
    )(x_flat, w_flat, b_2d)

    # (4, C_OUT, B*H*W) -> (4, B, C_OUT, H, W) -> slice the valid window
    # (also drops the roll wrap-around columns).
    out = out.reshape(nb, C_OUT, B, H, W).transpose(0, 2, 1, 3, 4)
    return out[:, :, :, :oh, :ow]


def init_params(key):
    """Deterministic synthetic params for the 4 conv branches (conv1..conv4)."""
    params = {}
    fan_in = C_IN * KH * KW
    bound = 1.0 / (fan_in ** 0.5)  # mimic PyTorch Conv2d default uniform init range
    for i in range(4):
        kw_, kb_ = jax.random.split(jax.random.fold_in(key, i))
        params[f"conv{i + 1}_w"] = jax.random.uniform(
            kw_, (C_OUT, C_IN, KH, KW), jnp.float32, -bound, bound)
        params[f"conv{i + 1}_b"] = jax.random.uniform(
            kb_, (C_OUT,), jnp.float32, -bound, bound)
    return params


def solution_v3_forward(params, sst, t300, ua, va):
    """Pallas implementation of SolutionV3.forward.

    NOTE: the PyTorch forward() discards the conv results and returns None.
    We return the four conv outputs so the kernel work is observable.
    """
    xs = jnp.stack([sst, t300, ua, va])                              # (4,B,12,H,W)
    ws = jnp.stack([params[f"conv{i}_w"] for i in range(1, 5)])      # (4,12,12,3,3)
    bs = jnp.stack([params[f"conv{i}_b"] for i in range(1, 5)])      # (4,12)
    y = fused_conv2d_valid(xs, ws, bs)                               # (4,B,12,oh,ow)
    # TODO(synk): pool1-3 / batch_norm / lstm / linear are declared in __init__
    # but never used by forward(), which returns None in the reference module.
    return y[0], y[1], y[2], y[3]


def _conv_ref(x, w, b):
    y = jax.lax.conv_general_dilated(
        x, w, window_strides=(1, 1), padding="VALID",
        dimension_numbers=("NCHW", "OIHW", "NCHW"))
    return y + b.reshape(1, C_OUT, 1, 1)


if __name__ == "__main__":
    key = jax.random.PRNGKey(0)
    params = init_params(jax.random.fold_in(key, 100))

    B, H, W = 2, 16, 16
    ks = jax.random.split(key, 4)
    sst = jax.random.normal(ks[0], (B, C_IN, H, W), jnp.float32)
    t300 = jax.random.normal(ks[1], (B, C_IN, H, W), jnp.float32)
    ua = jax.random.normal(ks[2], (B, C_IN, H, W), jnp.float32)
    va = jax.random.normal(ks[3], (B, C_IN, H, W), jnp.float32)

    outs = jax.block_until_ready(
        jax.jit(solution_v3_forward)(params, sst, t300, ua, va))

    # Sanity check against XLA's convolution.
    refs = (
        _conv_ref(sst, params["conv1_w"], params["conv1_b"]),
        _conv_ref(t300, params["conv2_w"], params["conv2_b"]),
        _conv_ref(ua, params["conv3_w"], params["conv3_b"]),
        _conv_ref(va, params["conv4_w"], params["conv4_b"]),
    )
    for o, r in zip(outs, refs):
        assert o.shape == (B, C_OUT, H - 2, W - 2)
        assert jnp.allclose(o, r, atol=1e-4, rtol=1e-4)

    print("KERNEL_OK")
</pallas_src>

<mosaic_0001>
module attributes {stable_mosaic.version = 11 : i64} {
  func.func @_fused_conv_kernel(%arg0: i32, %arg1: memref<1x12x512xf32, #tpu.memory_space<vmem>>, %arg2: memref<1x12x108xf32, #tpu.memory_space<vmem>>, %arg3: memref<1x12x1xf32, #tpu.memory_space<vmem>>, %arg4: memref<1x12x512xf32, #tpu.memory_space<vmem>>) attributes {dimension_semantics = [#tpu.dimension_semantics<parallel>], iteration_bounds = array<i64: 4>, scalar_prefetch = 0 : i64, scratch_operands = 0 : i64, tpu.core_type = #tpu.core_type<tc>, window_params = [{transform_indices = @transform_0, window_bounds = array<i64: 1, 12, 512>}, {transform_indices = @transform_1, window_bounds = array<i64: 1, 12, 108>}, {transform_indices = @transform_2, window_bounds = array<i64: 1, 12, 1>}, {transform_indices = @transform_3, window_bounds = array<i64: 1, 12, 512>}]} {
    %c0 = arith.constant 0 : index
    %c0_0 = arith.constant 0 : index
    %c0_1 = arith.constant 0 : index
    %0 = vector.load %arg1[%c0, %c0_0, %c0_1] : memref<1x12x512xf32, #tpu.memory_space<vmem>>, vector<1x12x512xf32>
    %1 = vector.shape_cast %0 : vector<1x12x512xf32> to vector<12x512xf32>
    %c511_i32 = arith.constant 511 : i32
    %2 = tpu.dynamic_rotate %1 by %c511_i32 dim 1 : vector<12x512xf32>, i32 -> vector<12x512xf32>
    %c510_i32 = arith.constant 510 : i32
    %3 = tpu.dynamic_rotate %1 by %c510_i32 dim 1 : vector<12x512xf32>, i32 -> vector<12x512xf32>
    %c496_i32 = arith.constant 496 : i32
    %4 = tpu.dynamic_rotate %1 by %c496_i32 dim 1 : vector<12x512xf32>, i32 -> vector<12x512xf32>
    %c495_i32 = arith.constant 495 : i32
    %5 = tpu.dynamic_rotate %1 by %c495_i32 dim 1 : vector<12x512xf32>, i32 -> vector<12x512xf32>
    %c494_i32 = arith.constant 494 : i32
    %6 = tpu.dynamic_rotate %1 by %c494_i32 dim 1 : vector<12x512xf32>, i32 -> vector<12x512xf32>
    %c480_i32 = arith.constant 480 : i32
    %7 = tpu.dynamic_rotate %1 by %c480_i32 dim 1 : vector<12x512xf32>, i32 -> vector<12x512xf32>
    %c479_i32 = arith.constant 479 : i32
    %8 = tpu.dynamic_rotate %1 by %c479_i32 dim 1 : vector<12x512xf32>, i32 -> vector<12x512xf32>
    %c478_i32 = arith.constant 478 : i32
    %9 = tpu.dynamic_rotate %1 by %c478_i32 dim 1 : vector<12x512xf32>, i32 -> vector<12x512xf32>
    %10 = tpu.concatenate %1, %2, %3, %4, %5, %6, %7, %8, %9 in 0 : vector<12x512xf32>, vector<12x512xf32>, vector<12x512xf32>, vector<12x512xf32>, vector<12x512xf32>, vector<12x512xf32>, vector<12x512xf32>, vector<12x512xf32>, vector<12x512xf32> -> vector<108x512xf32>
    %c0_2 = arith.constant 0 : index
    %c0_3 = arith.constant 0 : index
    %c0_4 = arith.constant 0 : index
    %11 = vector.load %arg2[%c0_2, %c0_3, %c0_4] : memref<1x12x108xf32, #tpu.memory_space<vmem>>, vector<1x12x108xf32>
    %12 = vector.shape_cast %11 : vector<1x12x108xf32> to vector<12x108xf32>
    %cst = arith.constant dense<0.000000e+00> : vector<12x512xf32>
    %13 = tpu.matmul %12, %10, %cst {dimension_numbers = #tpu.dot_dimension_numbers<[1], [0], [0], [1], [0, 0, 1, 1], [], []>} : vector<12x108xf32>, vector<108x512xf32>, vector<12x512xf32> -> vector<12x512xf32>
    %c0_5 = arith.constant 0 : index
    %c0_6 = arith.constant 0 : index
    %c0_7 = arith.constant 0 : index
    %14 = vector.load %arg3[%c0_5, %c0_6, %c0_7] : memref<1x12x1xf32, #tpu.memory_space<vmem>>, vector<1x12x1xf32>
    %15 = vector.shape_cast %14 : vector<1x12x1xf32> to vector<12x1xf32>
    %16 = vector.broadcast %15 : vector<12x1xf32> to vector<12x512xf32>
    %17 = arith.addf %13, %16 : vector<12x512xf32>
    %c0_8 = arith.constant 0 : index
    %c0_9 = arith.constant 0 : index
    %c0_10 = arith.constant 0 : index
    %18 = vector.load %arg4[%c0_8, %c0_9, %c0_10] : memref<1x12x512xf32, #tpu.memory_space<vmem>>, vector<1x12x512xf32>
    %19 = vector.shape_cast %18 : vector<1x12x512xf32> to vector<12x512xf32>
    %20 = vector.shape_cast %17 : vector<12x512xf32> to vector<1x12x512xf32>
    tpu.vector_store %arg4[%c0_8, %c0_9, %c0_10], %20 {strides = array<i32>} : memref<1x12x512xf32, #tpu.memory_space<vmem>>, vector<1x12x512xf32>,
    return
  }
  func.func @transform_0(%arg0: i32) -> (i32, i32, i32) {
    %c0_i32 = arith.constant 0 : i32
    %c0_i32_0 = arith.constant 0 : i32
    %c0_i32_1 = arith.constant 0 : i32
    return %arg0, %c0_i32, %c0_i32_0 : i32, i32, i32
  }
  func.func @transform_1(%arg0: i32) -> (i32, i32, i32) {
    %c0_i32 = arith.constant 0 : i32
    %c0_i32_0 = arith.constant 0 : i32
    %c0_i32_1 = arith.constant 0 : i32
    return %arg0, %c0_i32, %c0_i32_0 : i32, i32, i32
  }
  func.func @transform_2(%arg0: i32) -> (i32, i32, i32) {
    %c0_i32 = arith.constant 0 : i32
    %c0_i32_0 = arith.constant 0 : i32
    %c0_i32_1 = arith.constant 0 : i32
    return %arg0, %c0_i32, %c0_i32_0 : i32, i32, i32
  }
  func.func @transform_3(%arg0: i32) -> (i32, i32, i32) {
    %c0_i32 = arith.constant 0 : i32
    %c0_i32_0 = arith.constant 0 : i32
    %c0_i32_1 = arith.constant 0 : i32
    return %arg0, %c0_i32, %c0_i32_0 : i32, i32, i32
  }
}

</mosaic_0001>

<llo_original>
// kernel: solution_v3_forward.1
$region0: #{solution_v3_forward.1}
  #allocation0 [shape = 'u32[]', space=smem, size = 0x4, offset = 0x4, fixed_abs, tag = 'smem constant byte address 0x4 - core index']
  #allocation1 [shape = 'u32[144,128]{1,0:T(1,128)}', space=vmem, size = 0x12000, scoped, tag = 'internal scratch']
  %s0 = inlined_call_operand.vmem [shape: f32[4,12,512], index: 0, kind: input, shape index: {}]
  %s1 = inlined_call_operand.vmem [shape: f32[4,12,108], index: 1, kind: input, shape index: {}]
  %s2 = inlined_call_operand.vmem [shape: f32[4,12,1], index: 2, kind: input, shape index: {}]
  %s3 = inlined_call_operand.vmem [shape: f32[4,12,512], index: 3, kind: output, shape index: {}]
  %s4 = sld [smem:[#allocation0]]
  $region45: #{solution_v3_forward.1} parent=0
    _
  %s6 = ssub.s32 1, %s4
  %s7 = scalar_select 0, %s6, %s4
  loop: start=0, step=1, limit=6
  $region2: #{solution_v3_forward.1} parent=0 // loop_pre_header
    _
  $region3: #{solution_v3_forward.1} parent=0 // loop_header
    %s9 = sphi 0, %s13
    %p10 = scmp.ge.s32.totalorder %s9, 6
    %s19 = sphi 0, %s21
    %s22 = sphi 0, %s19
    %s23 = sphi 0, %s22
    %s39 = sphi 0, %s23
    %s45 = sphi 0, %s47
    %s48 = sphi 0, %s45
    %s49 = sphi 0, %s48
    %s65 = sphi 0, %s49
    %s71 = sphi 0, %s73
    %s74 = sphi 0, %s71
    %s75 = sphi 0, %s74
    %s91 = sphi 0, %s75
    %s97 = sphi 0, %s99
    %s100 = sphi 0, %s97
    %s101 = sphi 0, %s100
    %s117 = sphi 0, %s101
  $region4: #{solution_v3_forward.1} parent=0 // loop_header_branch
    %12 = sbr.rel (%p10) target = $region8
  $region5: #{solution_v3_forward.1} parent=0 // loop_body
    %s14 = ssub.s32 %s9, 1
    %s15 = ssub.s32 %s9, 2
    %s16 = sadd.s32 %s9, 1
    %s17 = ssub.s32 %s9, %s16
    %p18 = scmp.eq.s32.totalorder %s17, 0
    %s20 = sadd.s32 %s19, 1
    %s21 = scalar_select %p18, %s19, %s20
    %p24 = pneg %p18
    %p25 = scmp.eq.s32.totalorder %s9, 3
    %p26 = por %p24, %p25
    %p27 = scmp.ne.s32.totalorder %s19, %s22
    %p28 = scmp.eq.s32.totalorder %s9, 0
    %p29 = por %p27, %p28
    %p30 = scmp.ne.s32.totalorder %s19, %s22
    %p31 = scmp.eq.s32.totalorder %s14, 3
    %p32 = por %p30, %p31
    %p33 = scmp.ne.s32.totalorder %s22, %s23
    %p34 = scmp.eq.s32.totalorder %s14, 0
    %p35 = por %p33, %p34
    %p36 = scmp.ne.s32.totalorder %s22, %s23
    %p37 = scmp.eq.s32.totalorder %s15, 3
    %p38 = por %p36, %p37
    %p40 = scmp.ne.s32.totalorder %s23, %s39
    %p41 = scmp.eq.s32.totalorder %s15, 0
    %p42 = por %p40, %p41
    %s43 = ssub.s32 %s9, %s16
    %p44 = scmp.eq.s32.totalorder %s43, 0
    %s46 = sadd.s32 %s45, 1
    %s47 = scalar_select %p44, %s45, %s46
    %p50 = pneg %p44
    %p51 = scmp.eq.s32.totalorder %s9, 3
    %p52 = por %p50, %p51
    %p53 = scmp.ne.s32.totalorder %s45, %s48
    %p54 = scmp.eq.s32.totalorder %s9, 0
    %p55 = por %p53, %p54
    %p56 = scmp.ne.s32.totalorder %s45, %s48
    %p57 = scmp.eq.s32.totalorder %s14, 3
    %p58 = por %p56, %p57
    %p59 = scmp.ne.s32.totalorder %s48, %s49
    %p60 = scmp.eq.s32.totalorder %s14, 0
    %p61 = por %p59, %p60
    %p62 = scmp.ne.s32.totalorder %s48, %s49
    %p63 = scmp.eq.s32.totalorder %s15, 3
    %p64 = por %p62, %p63
    %p66 = scmp.ne.s32.totalorder %s49, %s65
    %p67 = scmp.eq.s32.totalorder %s15, 0
    %p68 = por %p66, %p67
    %s69 = ssub.s32 %s9, %s16
    %p70 = scmp.eq.s32.totalorder %s69, 0
    %s72 = sadd.s32 %s71, 1
    %s73 = scalar_select %p70, %s71, %s72
    %p76 = pneg %p70
    %p77 = scmp.eq.s32.totalorder %s9, 3
    %p78 = por %p76, %p77
    %p79 = scmp.ne.s32.totalorder %s71, %s74
    %p80 = scmp.eq.s32.totalorder %s9, 0
    %p81 = por %p79, %p80
    %p82 = scmp.ne.s32.totalorder %s71, %s74
    %p83 = scmp.eq.s32.totalorder %s14, 3
    %p84 = por %p82, %p83
    %p85 = scmp.ne.s32.totalorder %s74, %s75
    %p86 = scmp.eq.s32.totalorder %s14, 0
    %p87 = por %p85, %p86
    %p88 = scmp.ne.s32.totalorder %s74, %s75
    %p89 = scmp.eq.s32.totalorder %s15, 3
    %p90 = por %p88, %p89
    %p92 = scmp.ne.s32.totalorder %s75, %s91
    %p93 = scmp.eq.s32.totalorder %s15, 0
    %p94 = por %p92, %p93
    %s95 = ssub.s32 %s9, %s16
    %p96 = scmp.eq.s32.totalorder %s95, 0
    %s98 = sadd.s32 %s97, 1
    %s99 = scalar_select %p96, %s97, %s98
    %p102 = pneg %p96
    %p103 = scmp.eq.s32.totalorder %s9, 3
    %p104 = por %p102, %p103
    %p105 = scmp.ne.s32.totalorder %s97, %s100
    %p106 = scmp.eq.s32.totalorder %s9, 0
    %p107 = por %p105, %p106
    %p108 = scmp.ne.s32.totalorder %s97, %s100
    %p109 = scmp.eq.s32.totalorder %s14, 3
    %p110 = por %p108, %p109
    %p111 = scmp.ne.s32.totalorder %s100, %s101
    %p112 = scmp.eq.s32.totalorder %s14, 0
    %p113 = por %p111, %p112
    %p114 = scmp.ne.s32.totalorder %s100, %s101
    %p115 = scmp.eq.s32.totalorder %s15, 3
    %p116 = por %p114, %p115
    %p118 = scmp.ne.s32.totalorder %s101, %s117
    %p119 = scmp.eq.s32.totalorder %s15, 0
    %p120 = por %p118, %p119
    %p121 = scmp.le.s32.totalorder 1, %s9
    %p122 = scmp.lt.s32.totalorder %s9, 5
    %p123 = pnand %p121, %p122
    %p124 = pneg %p123
    // Predicated region
    $region9: #{solution_v3_forward.1} parent=5 // pred_check
      _
    $region10: #{solution_v3_forward.1} parent=5 // pred_check_branch
      %126 = sbr.rel (%p123) target = $region12
    $region11: #{solution_v3_forward.1} parent=5 // pred_region
      %s127 = ssub.s32 %s9, 1
    $region12: #{solution_v3_forward.1} parent=5 // pred_fallthru
      _
    %p128 = scmp.lt.s32.totalorder %s9, 4
    // Predicated region
    $region13: #{solution_v3_forward.1} parent=5 // pred_check
      %p129 = pneg %p128
    $region14: #{solution_v3_forward.1} parent=5 // pred_check_branch
      %131 = sbr.rel (%p129) target = $region16
    $region15: #{solution_v3_forward.1} parent=5 // pred_region
      // Predicated region
      $region17: #{solution_v3_forward.1} parent=15 // pred_check
        %p132 = pneg %p29
      $region18: #{solution_v3_forward.1} parent=15 // pred_check_branch
        %134 = sbr.rel (%p132) target = $region20
      $region19: #{solution_v3_forward.1} parent=15 // pred_region
        %p135 = scmp.lt.s32.totalorder %s9, 3
        %s136 = scalar_select %p135, %s9, 3
        %s137 = smul.addr %s136, 8
        %s138 = smul.addr %s137, 8
        %s139 = scalar_lea.vmem %s0, %s138
      $region20: #{solution_v3_forward.1} parent=15 // pred_fallthru
        _
      // Predicated region
      $region21: #{solution_v3_forward.1} parent=15 // pred_check
        %p140 = pneg %p55
      $region22: #{solution_v3_forward.1} parent=15 // pred_check_branch
        %142 = sbr.rel (%p140) target = $region24
      $region23: #{solution_v3_forward.1} parent=15 // pred_region
        %p143 = scmp.lt.s32.totalorder %s9, 3
        %s144 = scalar_select %p143, %s9, 3
        %s145 = smul.addr %s144, 2
        %s146 = smul.addr %s145, 8
        %s147 = scalar_lea.vmem %s1, %s146
      $region24: #{solution_v3_forward.1} parent=15 // pred_fallthru
        _
      // Predicated region
      $region25: #{solution_v3_forward.1} parent=15 // pred_check
        %p148 = pneg %p81
      $region26: #{solution_v3_forward.1} parent=15 // pred_check_branch
        %150 = sbr.rel (%p148) target = $region28
      $region27: #{solution_v3_forward.1} parent=15 // pred_region
        %p151 = scmp.lt.s32.totalorder %s9, 3
        %s152 = scalar_select %p151, %s9, 3
        %s153 = smul.addr %s152, 2
        %s154 = smul.addr %s153, 8
        %s155 = scalar_lea.vmem %s2, %s154
      $region28: #{solution_v3_forward.1} parent=15 // pred_fallthru
        _
    $region16: #{solution_v3_forward.1} parent=5 // pred_fallthru
      _
    %p156 = scmp.le.s32.totalorder 1, %s9
    %p157 = scmp.lt.s32.totalorder %s9, 5
    %p158 = pnand %p156, %p157
    %p159 = pneg %p158
    // Predicated region
    $region29: #{solution_v3_forward.1} parent=5 // pred_check
      _
    $region30: #{solution_v3_forward.1} parent=5 // pred_check_branch
      %161 = sbr.rel (%p158) target = $region32
    $region31: #{solution_v3_forward.1} parent=5 // pred_region
      %s162 = ssub.s32 %s9, 1
      %p163 = scmp.lt.s32.totalorder %s14, 3
      %s164 = scalar_select %p163, %s14, 3
      %s165 = smul.addr %s164, 8
      %s166 = smul.addr %s165, 8
      %s167 = scalar_lea.vmem %s0, %s166
      %p168 = pneg %p35
      %p169 = pneg %p32
      %p170 = scmp.lt.s32.totalorder %s14, 3
      %s171 = scalar_select %p170, %s14, 3
      %s172 = smul.addr %s171, 2
      %s173 = smul.addr %s172, 8
      %s174 = scalar_lea.vmem %s1, %s173
      %p175 = pneg %p61
      %p176 = pneg %p58
      %p177 = scmp.lt.s32.totalorder %s14, 3
      %s178 = scalar_select %p177, %s14, 3
      %s179 = smul.addr %s178, 2
      %s180 = smul.addr %s179, 8
      %s181 = scalar_lea.vmem %s2, %s180
      %p182 = pneg %p87
      %p183 = pneg %p84
      %p184 = pneg %p113
      %p185 = pneg %p110
      %p186 = scmp.lt.s32.totalorder %s14, 3
      %s187 = scalar_select %p186, %s14, 3
      %s188 = smul.addr %s187, 8
      %s189 = smul.addr %s188, 8
      %s190 = scalar_lea.vmem %s3, %s189
      %p191 = scmp.lt.s32.totalorder %s14, 3
      %s192 = scalar_select %p191, %s14, 3
      %s193 = smul.addr %s192, 8
      %s194 = smul.addr %s193, 8
      %s195 = scalar_lea.vmem %s0, %s194
      %p196 = scmp.lt.s32.totalorder %s14, 3
      %s197 = scalar_select %p196, %s14, 3
      %s198 = smul.addr %s197, 2
      %s199 = smul.addr %s198, 8
      %s200 = scalar_lea.vmem %s1, %s199
      %p201 = scmp.lt.s32.totalorder %s14, 3
      %s202 = scalar_select %p201, %s14, 3
      %s203 = smul.addr %s202, 2
      %s204 = smul.addr %s203, 8
      %s205 = scalar_lea.vmem %s2, %s204
      %p206 = scmp.lt.s32.totalorder %s14, 3
      %s207 = scalar_select %p206, %s14, 3
      %s208 = smul.addr %s207, 8
      %s209 = smul.addr %s208, 8
      %s210 = scalar_lea.vmem %s3, %s209
      %v211 = vld [vmem:[%s195] sm:$0xff]
      %v212 = vld [vmem:[%s195 + $0x8] sm:$0xff]
      %v213 = vld [vmem:[%s195 + $0x10] sm:$0xff]
      %v214 = vld [vmem:[%s195 + $0x18] sm:$0xff]
      %v215 = vld [vmem:[%s195 + $0x20] sm:$0xf]
      %v216 = vld [vmem:[%s195 + $0x28] sm:$0xf]
      %v217 = vld [vmem:[%s195 + $0x30] sm:$0xf]
      %v218 = vld [vmem:[%s195 + $0x38] sm:$0xf]
      %219 = vrot.lane.b32.xlu0 %v211, 127
      %v220 = vpop.permute.xlu0 %219
      %221 = vrot.lane.b32.xlu0 %v215, 127
      %v222 = vpop.permute.xlu0 %221
      %223 = vrot.lane.b32.xlu0 %v212, 127
      %v224 = vpop.permute.xlu0 %223
      %225 = vrot.lane.b32.xlu0 %v216, 127
      %v226 = vpop.permute.xlu0 %225
      %227 = vrot.lane.b32.xlu0 %v213, 127
      %v228 = vpop.permute.xlu0 %227
      %229 = vrot.lane.b32.xlu0 %v217, 127
      %v230 = vpop.permute.xlu0 %229
      %231 = vrot.lane.b32.xlu0 %v214, 127
      %v232 = vpop.permute.xlu0 %231
      %233 = vrot.lane.b32.xlu0 %v218, 127
      %v234 = vpop.permute.xlu0 %233
      %v235 = vlaneseq
      %v236 = vand.u32 %v235, 127
      %vm237 = vcmp.lt.s32.totalorder %v236, 127
      %v238 = vsel %vm237, %v228, %v232
      %v239 = vsel %vm237, %v230, %v234
      %v240 = vsel %vm237, %v224, %v228
      %v241 = vsel %vm237, %v226, %v230
      %v242 = vsel %vm237, %v220, %v224
      %v243 = vsel %vm237, %v222, %v226
      %v244 = vsel %vm237, %v232, %v220
      %v245 = vsel %vm237, %v234, %v222
      %246 = vrot.lane.b32.xlu0 %v211, 126
      %v247 = vpop.permute.xlu0 %246
      %248 = vrot.lane.b32.xlu0 %v215, 126
      %v249 = vpop.permute.xlu0 %248
      %250 = vrot.lane.b32.xlu0 %v212, 126
      %v251 = vpop.permute.xlu0 %250
      %252 = vrot.lane.b32.xlu0 %v216, 126
      %v253 = vpop.permute.xlu0 %252
      %254 = vrot.lane.b32.xlu0 %v213, 126
      %v255 = vpop.permute.xlu0 %254
      %256 = vrot.lane.b32.xlu0 %v217, 126
      %v257 = vpop.permute.xlu0 %256
      %258 = vrot.lane.b32.xlu0 %v214, 126
      %v259 = vpop.permute.xlu0 %258
      %260 = vrot.lane.b32.xlu0 %v218, 126
      %v261 = vpop.permute.xlu0 %260
      %vm262 = vcmp.lt.s32.totalorder %v236, 126
      %v263 = vsel %vm262, %v255, %v259
      %v264 = vsel %vm262, %v257, %v261
      %v265 = vsel %vm262, %v251, %v255
      %v266 = vsel %vm262, %v253, %v257
      %v267 = vsel %vm262, %v247, %v251
      %v268 = vsel %vm262, %v249, %v253
      %v269 = vsel %vm262, %v259, %v247
      %v270 = vsel %vm262, %v261, %v249
      %271 = vrot.lane.b32.xlu0 %v211, 112
      %v272 = vpop.permute.xlu0 %271
      %273 = vrot.lane.b32.xlu0 %v215, 112
      %v274 = vpop.permute.xlu0 %273
      %275 = vrot.lane.b32.xlu0 %v212, 112
      %v276 = vpop.permute.xlu0 %275
      %277 = vrot.lane.b32.xlu0 %v216, 112
      %v278 = vpop.permute.xlu0 %277
      %279 = vrot.lane.b32.xlu0 %v213, 112
      %v280 = vpop.permute.xlu0 %279
      %281 = vrot.lane.b32.xlu0 %v217, 112
      %v282 = vpop.permute.xlu0 %281
      %283 = vrot.lane.b32.xlu0 %v214, 112
      %v284 = vpop.permute.xlu0 %283
      %285 = vrot.lane.b32.xlu0 %v218, 112
      %v286 = vpop.permute.xlu0 %285
      %vm287 = vcmp.lt.s32.totalorder %v236, 112
      %v288 = vsel %vm287, %v280, %v284
      %v289 = vsel %vm287, %v282, %v286
      %v290 = vsel %vm287, %v276, %v280
      %v291 = vsel %vm287, %v278, %v282
      %v292 = vsel %vm287, %v272, %v276
      %v293 = vsel %vm287, %v274, %v278
      %v294 = vsel %vm287, %v284, %v272
      %v295 = vsel %vm287, %v286, %v274
      %296 = vrot.lane.b32.xlu0 %v211, 111
      %v297 = vpop.permute.xlu0 %296
      %298 = vrot.lane.b32.xlu0 %v215, 111
      %v299 = vpop.permute.xlu0 %298
      %300 = vrot.lane.b32.xlu0 %v212, 111
      %v301 = vpop.permute.xlu0 %300
      %302 = vrot.lane.b32.xlu0 %v216, 111
      %v303 = vpop.permute.xlu0 %302
      %304 = vrot.lane.b32.xlu0 %v213, 111
      %v305 = vpop.permute.xlu0 %304
      %306 = vrot.lane.b32.xlu0 %v217, 111
      %v307 = vpop.permute.xlu0 %306
      %308 = vrot.lane.b32.xlu0 %v214, 111
      %v309 = vpop.permute.xlu0 %308
      %310 = vrot.lane.b32.xlu0 %v218, 111
      %v311 = vpop.permute.xlu0 %310
      %vm312 = vcmp.lt.s32.totalorder %v236, 111
      %v313 = vsel %vm312, %v305, %v309
      %v314 = vsel %vm312, %v307, %v311
      %v315 = vsel %vm312, %v301, %v305
      %v316 = vsel %vm312, %v303, %v307
      %v317 = vsel %vm312, %v297, %v301
      %v318 = vsel %vm312, %v299, %v303
      %v319 = vsel %vm312, %v309, %v297
      %v320 = vsel %vm312, %v311, %v299
      %321 = vrot.lane.b32.xlu0 %v211, 110
      %v322 = vpop.permute.xlu0 %321
      %323 = vrot.lane.b32.xlu0 %v215, 110
      %v324 = vpop.permute.xlu0 %323
      %325 = vrot.lane.b32.xlu0 %v212, 110
      %v326 = vpop.permute.xlu0 %325
      %327 = vrot.lane.b32.xlu0 %v216, 110
      %v328 = vpop.permute.xlu0 %327
      %329 = vrot.lane.b32.xlu0 %v213, 110
      %v330 = vpop.permute.xlu0 %329
      %331 = vrot.lane.b32.xlu0 %v217, 110
      %v332 = vpop.permute.xlu0 %331
      %333 = vrot.lane.b32.xlu0 %v214, 110
      %v334 = vpop.permute.xlu0 %333
      %335 = vrot.lane.b32.xlu0 %v218, 110
      %v336 = vpop.permute.xlu0 %335
      %vm337 = vcmp.lt.s32.totalorder %v236, 110
      %v338 = vsel %vm337, %v330, %v334
      %v339 = vsel %vm337, %v332, %v336
      %v340 = vsel %vm337, %v326, %v330
      %v341 = vsel %vm337, %v328, %v332
      %v342 = vsel %vm337, %v322, %v326
      %v343 = vsel %vm337, %v324, %v328
      %v344 = vsel %vm337, %v334, %v322
      %v345 = vsel %vm337, %v336, %v324
      %346 = vrot.lane.b32.xlu0 %v211, 96
      %v347 = vpop.permute.xlu0 %346
      %348 = vrot.lane.b32.xlu0 %v215, 96
      %v349 = vpop.permute.xlu0 %348
      %350 = vrot.lane.b32.xlu0 %v212, 96
      %v351 = vpop.permute.xlu0 %350
      %352 = vrot.lane.b32.xlu0 %v216, 96
      %v353 = vpop.permute.xlu0 %352
      %354 = vrot.lane.b32.xlu0 %v213, 96
      %v355 = vpop.permute.xlu0 %354
      %356 = vrot.lane.b32.xlu0 %v217, 96
      %v357 = vpop.permute.xlu0 %356
      %358 = vrot.lane.b32.xlu0 %v214, 96
      %v359 = vpop.permute.xlu0 %358
      %360 = vrot.lane.b32.xlu0 %v218, 96
      %v361 = vpop.permute.xlu0 %360
      %vm362 = vcmp.lt.s32.totalorder %v236, 96
      %v363 = vsel %vm362, %v355, %v359
      %v364 = vsel %vm362, %v357, %v361
      %v365 = vsel %vm362, %v351, %v355
      %v366 = vsel %vm362, %v353, %v357
      %v367 = vsel %vm362, %v347, %v351
      %v368 = vsel %vm362, %v349, %v353
      %v369 = vsel %vm362, %v359, %v347
      %v370 = vsel %vm362, %v361, %v349
      %371 = vrot.lane.b32.xlu0 %v211, 95
      %v372 = vpop.permute.xlu0 %371
      %373 = vrot.lane.b32.xlu0 %v215, 95
      %v374 = vpop.permute.xlu0 %373
      %375 = vrot.lane.b32.xlu0 %v212, 95
      %v376 = vpop.permute.xlu0 %375
      %377 = vrot.lane.b32.xlu0 %v216, 95
      %v378 = vpop.permute.xlu0 %377
      %379 = vrot.lane.b32.xlu0 %v213, 95
      %v380 = vpop.permute.xlu0 %379
      %381 = vrot.lane.b32.xlu0 %v217, 95
      %v382 = vpop.permute.xlu0 %381
      %383 = vrot.lane.b32.xlu0 %v214, 95
      %v384 = vpop.permute.xlu0 %383
      %385 = vrot.lane.b32.xlu0 %v218, 95
      %v386 = vpop.permute.xlu0 %385
      %vm387 = vcmp.lt.s32.totalorder %v236, 95
      %v388 = vsel %vm387, %v380, %v384
      %v389 = vsel %vm387, %v382, %v386
      %v390 = vsel %vm387, %v376, %v380
      %v391 = vsel %vm387, %v378, %v382
      %v392 = vsel %vm387, %v372, %v376
      %v393 = vsel %vm387, %v374, %v378
      %v394 = vsel %vm387, %v384, %v372
      %v395 = vsel %vm387, %v386, %v374
      %396 = vrot.lane.b32.xlu0 %v211, 94
      %v397 = vpop.permute.xlu0 %396
      %398 = vrot.lane.b32.xlu0 %v215, 94
      %v399 = vpop.permute.xlu0 %398
      %400 = vrot.lane.b32.xlu0 %v212, 94
      %v401 = vpop.permute.xlu0 %400
      %402 = vrot.lane.b32.xlu0 %v216, 94
      %v403 = vpop.permute.xlu0 %402
      %404 = vrot.lane.b32.xlu0 %v213, 94
      %v405 = vpop.permute.xlu0 %404
      %406 = vrot.lane.b32.xlu0 %v217, 94
      %v407 = vpop.permute.xlu0 %406
      %408 = vrot.lane.b32.xlu0 %v214, 94
      %v409 = vpop.permute.xlu0 %408
      %410 = vrot.lane.b32.xlu0 %v218, 94
      %v411 = vpop.permute.xlu0 %410
      %vm412 = vcmp.lt.s32.totalorder %v236, 94
      %v413 = vsel %vm412, %v405, %v409
      %v414 = vsel %vm412, %v407, %v411
      %v415 = vsel %vm412, %v401, %v405
      %v416 = vsel %vm412, %v403, %v407
      %v417 = vsel %vm412, %v397, %v401
      %v418 = vsel %vm412, %v399, %v403
      %v419 = vsel %vm412, %v409, %v397
      %v420 = vsel %vm412, %v411, %v399
      %vm429 = vcmask 1043456
      %v430 = vrot.slane %v242, 4
      %v431 = vrot.slane %v240, 4
      %v432 = vrot.slane %v238, 4
      %v433 = vrot.slane %v244, 4
      %v434 = vrot.slane %v243, 4
      %v435 = vsel %vm429, %v430, %v434
      %v436 = vrot.slane %v241, 4
      %v437 = vsel %vm429, %v431, %v436
      %v438 = vrot.slane %v239, 4
      %v439 = vsel %vm429, %v432, %v438
      %v440 = vrot.slane %v245, 4
      %v441 = vsel %vm429, %v433, %v440
      %v458 = vrot.slane %v292, 4
      %v459 = vrot.slane %v290, 4
      %v460 = vrot.slane %v288, 4
      %v461 = vrot.slane %v294, 4
      %v462 = vrot.slane %v293, 4
      %v463 = vsel %vm429, %v458, %v462
      %v464 = vrot.slane %v291, 4
      %v465 = vsel %vm429, %v459, %v464
      %v466 = vrot.slane %v289, 4
      %v467 = vsel %vm429, %v460, %v466
      %v468 = vrot.slane %v295, 4
      %v469 = vsel %vm429, %v461, %v468
      %v486 = vrot.slane %v342, 4
      %v487 = vrot.slane %v340, 4
      %v488 = vrot.slane %v338, 4
      %v489 = vrot.slane %v344, 4
      %v490 = vrot.slane %v343, 4
      %v491 = vsel %vm429, %v486, %v490
      %v492 = vrot.slane %v341, 4
      %v493 = vsel %vm429, %v487, %v492
      %v494 = vrot.slane %v339, 4
      %v495 = vsel %vm429, %v488, %v494
      %v496 = vrot.slane %v345, 4
      %v497 = vsel %vm429, %v489, %v496
      %v514 = vrot.slane %v392, 4
      %v515 = vrot.slane %v390, 4
      %v516 = vrot.slane %v388, 4
      %v517 = vrot.slane %v394, 4
      %v518 = vrot.slane %v393, 4
      %v519 = vsel %vm429, %v514, %v518
      %v520 = vrot.slane %v391, 4
      %v521 = vsel %vm429, %v515, %v520
      %v522 = vrot.slane %v389, 4
      %v523 = vsel %vm429, %v516, %v522
      %v524 = vrot.slane %v395, 4
      %v525 = vsel %vm429, %v517, %v524
      %v534 = vsel %vm429, %v215, %v430
      %v535 = vsel %vm429, %v216, %v431
      %v536 = vsel %vm429, %v217, %v432
      %v537 = vsel %vm429, %v218, %v433
      %v538 = vsel %vm429, %v268, %v458
      %v539 = vsel %vm429, %v266, %v459
      %v540 = vsel %vm429, %v264, %v460
      %v541 = vsel %vm429, %v270, %v461
      %v542 = vsel %vm429, %v318, %v486
      %v543 = vsel %vm429, %v316, %v487
      %v544 = vsel %vm429, %v314, %v488
      %v545 = vsel %vm429, %v320, %v489
      %v546 = vsel %vm429, %v368, %v514
      %v547 = vsel %vm429, %v366, %v515
      %v548 = vsel %vm429, %v364, %v516
      %v549 = vsel %vm429, %v370, %v517
      %v550 = vld [vmem:[%s200] sm:$0xff]
      %v551 = vld [vmem:[%s200 + $0x8] sm:$0xf]
      %v552 = vld [vmem:[%s205] sm:$0xff]
      %v553 = vld [vmem:[%s205 + $0x8] sm:$0xf]
      %555 = vset.pattern.permute.xlu0 0
      %556 = vperm.xlu0 %555, %v552
      %v557 = vpop.permute.xlu0 %556
      %560 = vset.pattern.permute.xlu0 0
      %561 = vperm.xlu0 %560, %v553
      %v562 = vpop.permute.xlu0 %561
      %vm564 = vcmask 883712
      %v566 = vsel %vm564, %v550, 0
      %v569 = vsel %vm564, %v551, 0
      %v572 = vsel %vm429, %v418, 0
      %v575 = vsel %vm429, %v416, 0
      %v578 = vsel %vm429, %v414, 0
      %v581 = vsel %vm429, %v420, 0
      %583 = vmatprep.subr.mxu0 0.0
      %584 = vmatpush1.msra.mxu0 0.0
      %585 = vmatprep.subr.mxu0 0.0
      %586 = vmatpush1.msra.mxu0 0.0
      %587 = vmatprep.subr.mxu0 %v575
      %588 = vmatpush1.msra.mxu0 %v572
      %589 = vmatprep.subr.mxu0 %v415
      %590 = vmatpush1.msra.mxu0 %v417
      %591 = vmatprep.subr.mxu0 %v521
      %592 = vmatpush1.msra.mxu0 %v519
      %593 = vmatprep.subr.mxu0 %v547
      %594 = vmatpush1.msra.mxu0 %v546
      %595 = vmatprep.subr.mxu0 %v365
      %596 = vmatpush1.msra.mxu0 %v367
      %597 = vmatprep.subr.mxu0 %v493
      %598 = vmatpush1.msra.mxu0 %v491
      %599 = vmatprep.subr.mxu0 %v543
      %600 = vmatpush1.msra.mxu0 %v542
      %601 = vmatprep.subr.mxu0 %v315
      %602 = vmatpush1.msra.mxu0 %v317
      %603 = vmatprep.subr.mxu0 %v465
      %604 = vmatpush1.msra.mxu0 %v463
      %605 = vmatprep.subr.mxu0 %v539
      %606 = vmatpush1.msra.mxu0 %v538
      %607 = vmatprep.subr.mxu0 %v265
      %608 = vmatpush1.msra.mxu0 %v267
      %609 = vmatprep.subr.mxu0 %v437
      %610 = vmatpush1.msra.mxu0 %v435
      %611 = vmatprep.subr.mxu0 %v535
      %612 = vmatpush1.msra.mxu0 %v534
      %613 = vmatprep.subr.mxu0 %v212
      %614 = vmatpush1.msra.mxu0 %v211
      %615 = vmatprep.subr.mxu0 0.0
      %616 = vmatpush2.msra.mxu0 0.0
      %617 = vmatprep.subr.mxu0 0.0
      %618 = vmatpush2.msra.mxu0 0.0
      %619 = vmatprep.subr.mxu0 0.0
      %620 = vmatpush2.msra.mxu0 0.0
      %621 = vmatprep.subr.mxu0 0.0
      %622 = vmatpush2.msra.mxu0 0.0
      %623 = vmatprep.subr.mxu0 0.0
      %624 = vmatpush2.msra.mxu0 0.0
      %625 = vmatprep.subr.mxu0 0.0
      %626 = vmatpush2.msra.mxu0 0.0
      %627 = vmatprep.subr.mxu0 0.0
      %628 = vmatpush2.msra.mxu0 0.0
      %629 = vmatprep.subr.mxu0 0.0
      %630 = vmatpush2.msra.mxu0 0.0
      %631 = vmatprep.subr.mxu0 0.0
      %632 = vmatpush2.msra.mxu0 0.0
      %633 = vmatprep.subr.mxu0 0.0
      %634 = vmatpush2.msra.mxu0 0.0
      %635 = vmatprep.subr.mxu0 0.0
      %636 = vmatpush2.msra.mxu0 0.0
      %637 = vmatprep.subr.mxu0 0.0
      %638 = vmatpush2.msra.mxu0 0.0
      %639 = vmatprep.subr.mxu0 0.0
      %640 = vmatpush2.msra.mxu0 0.0
      %641 = vmatprep.subr.mxu0 0.0
      %642 = vmatpush2.msra.mxu0 0.0
      %643 = vmatprep.subr.mxu0 0.0
      %644 = vmatpush2.msra.mxu0 0.0
      %645 = vmatprep.subr.mxu0 0.0
      %646 = vmatpush2.msra.mxu0 0.0
      %647 = vmatprep.mubr.f32.mxu0 0.0
      %648 = vmatmul.mubr.f32.gmra.mxu0 %v566
      %v649 = vpop.f32.mrf.mxu0
      %v650 = vadd.f32 %v557, %v649
      %v651 = vpop.f32.mrf.mxu0
      %v652 = vadd.f32 %v557, %v651
      %653 = vmatprep.mubr.f32.mxu0 0.0
      %654 = vmatmul.mubr.f32.gmra.mxu0 %v569
      %v655 = vpop.f32.mrf.mxu0
      %v656 = vadd.f32 %v562, %v655
      %v657 = vpop.f32.mrf.mxu0
      %v658 = vadd.f32 %v562, %v657
      %659 = vdwg.mxu0
      %660 = vmatprep.subr.mxu0 0.0
      %661 = vmatpush1.msra.mxu0 0.0
      %662 = vmatprep.subr.mxu0 0.0
      %663 = vmatpush1.msra.mxu0 0.0
      %664 = vmatprep.subr.mxu0 %v581
      %665 = vmatpush1.msra.mxu0 %v578
      %666 = vmatprep.subr.mxu0 %v419
      %667 = vmatpush1.msra.mxu0 %v413
      %668 = vmatprep.subr.mxu0 %v525
      %669 = vmatpush1.msra.mxu0 %v523
      %670 = vmatprep.subr.mxu0 %v549
      %671 = vmatpush1.msra.mxu0 %v548
      %672 = vmatprep.subr.mxu0 %v369
      %673 = vmatpush1.msra.mxu0 %v363
      %674 = vmatprep.subr.mxu0 %v497
      %675 = vmatpush1.msra.mxu0 %v495
      %676 = vmatprep.subr.mxu0 %v545
      %677 = vmatpush1.msra.mxu0 %v544
      %678 = vmatprep.subr.mxu0 %v319
      %679 = vmatpush1.msra.mxu0 %v313
      %680 = vmatprep.subr.mxu0 %v469
      %681 = vmatpush1.msra.mxu0 %v467
      %682 = vmatprep.subr.mxu0 %v541
      %683 = vmatpush1.msra.mxu0 %v540
      %684 = vmatprep.subr.mxu0 %v269
      %685 = vmatpush1.msra.mxu0 %v263
      %686 = vmatprep.subr.mxu0 %v441
      %687 = vmatpush1.msra.mxu0 %v439
      %688 = vmatprep.subr.mxu0 %v537
      %689 = vmatpush1.msra.mxu0 %v536
      %690 = vmatprep.subr.mxu0 %v214
      %691 = vmatpush1.msra.mxu0 %v213
      %692 = vmatprep.subr.mxu0 0.0
      %693 = vmatpush2.msra.mxu0 0.0
      %694 = vmatprep.subr.mxu0 0.0
      %695 = vmatpush2.msra.mxu0 0.0
      %696 = vmatprep.subr.mxu0 0.0
      %697 = vmatpush2.msra.mxu0 0.0
      %698 = vmatprep.subr.mxu0 0.0
      %699 = vmatpush2.msra.mxu0 0.0
      %700 = vmatprep.subr.mxu0 0.0
      %701 = vmatpush2.msra.mxu0 0.0
      %702 = vmatprep.subr.mxu0 0.0
      %703 = vmatpush2.msra.mxu0 0.0
      %704 = vmatprep.subr.mxu0 0.0
      %705 = vmatpush2.msra.mxu0 0.0
      %706 = vmatprep.subr.mxu0 0.0
      %707 = vmatpush2.msra.mxu0 0.0
      %708 = vmatprep.subr.mxu0 0.0
      %709 = vmatpush2.msra.mxu0 0.0
      %710 = vmatprep.subr.mxu0 0.0
      %711 = vmatpush2.msra.mxu0 0.0
      %712 = vmatprep.subr.mxu0 0.0
      %713 = vmatpush2.msra.mxu0 0.0
      %714 = vmatprep.subr.mxu0 0.0
      %715 = vmatpush2.msra.mxu0 0.0
      %716 = vmatprep.subr.mxu0 0.0
      %717 = vmatpush2.msra.mxu0 0.0
      %718 = vmatprep.subr.mxu0 0.0
      %719 = vmatpush2.msra.mxu0 0.0
      %720 = vmatprep.subr.mxu0 0.0
      %721 = vmatpush2.msra.mxu0 0.0
      %722 = vmatprep.subr.mxu0 0.0
      %723 = vmatpush2.msra.mxu0 0.0
      %724 = vmatprep.mubr.f32.mxu0 0.0
      %725 = vmatmul.mubr.f32.gmra.mxu0 %v566
      %v726 = vpop.f32.mrf.mxu0
      %v727 = vadd.f32 %v557, %v726
      %v728 = vpop.f32.mrf.mxu0
      %v729 = vadd.f32 %v557, %v728
      %730 = vmatprep.mubr.f32.mxu0 0.0
      %731 = vmatmul.mubr.f32.gmra.mxu0 %v569
      %v732 = vpop.f32.mrf.mxu0
      %v733 = vadd.f32 %v562, %v732
      %v734 = vpop.f32.mrf.mxu0
      %v735 = vadd.f32 %v562, %v734
      %736 = vdwg.mxu0
      %737 = vst [vmem:[%s210] sm:$0xff] %v650
      %738 = vst [vmem:[%s210 + $0x8] sm:$0xff] %v652
      %739 = vst [vmem:[%s210 + $0x10] sm:$0xff] %v727
      %740 = vst [vmem:[%s210 + $0x18] sm:$0xff] %v729
      %741 = vst [vmem:[%s210 + $0x20] sm:$0xf] %v656
      %742 = vst [vmem:[%s210 + $0x28] sm:$0xf] %v658
      %743 = vst [vmem:[%s210 + $0x30] sm:$0xf] %v733
      %744 = vst [vmem:[%s210 + $0x38] sm:$0xf] %v735
      %p745 = scmp.lt.s32.totalorder %s14, 3
      %s746 = scalar_select %p745, %s14, 3
      %s747 = smul.addr %s746, 8
      %s748 = smul.addr %s747, 8
      %s749 = scalar_lea.vmem %s3, %s748
      // Predicated region
      $region33: #{solution_v3_forward.1} parent=31 // pred_check
        %p750 = pneg %p110
      $region34: #{solution_v3_forward.1} parent=31 // pred_check_branch
        %752 = sbr.rel (%p750) target = $region36
      $region35: #{solution_v3_forward.1} parent=31 // pred_region
        _
      $region36: #{solution_v3_forward.1} parent=31 // pred_fallthru
        _
    $region32: #{solution_v3_forward.1} parent=5 // pred_fallthru
      _
    %p753 = scmp.le.s32.totalorder 2, %s9
    // Predicated region
    $region37: #{solution_v3_forward.1} parent=5 // pred_check
      %p754 = pneg %p753
    $region38: #{solution_v3_forward.1} parent=5 // pred_check_branch
      %756 = sbr.rel (%p754) target = $region40
    $region39: #{solution_v3_forward.1} parent=5 // pred_region
      %s757 = ssub.s32 %s9, 2
      // Predicated region
      $region41: #{solution_v3_forward.1} parent=39 // pred_check
        %p758 = pneg %p116
      $region42: #{solution_v3_forward.1} parent=39 // pred_check_branch
        %760 = sbr.rel (%p758) target = $region44
      $region43: #{solution_v3_forward.1} parent=39 // pred_region
        %p761 = scmp.lt.s32.totalorder %s15, 3
        %s762 = scalar_select %p761, %s15, 3
        %s763 = smul.addr %s762, 8
        %s764 = smul.addr %s763, 8
        %s765 = scalar_lea.vmem %s3, %s764
      $region44: #{solution_v3_forward.1} parent=39 // pred_fallthru
        _
    $region40: #{solution_v3_forward.1} parent=5 // pred_fallthru
      _
  $region6: #{solution_v3_forward.1} parent=0 // loop_footer
    %s13 = sadd.s32 1, %s9
  $region7: #{solution_v3_forward.1} parent=0 // loop_footer_branch
    %8 = sbr.rel target = $region3
  $region8: #{solution_v3_forward.1} parent=0 // loop_exit
    _

</llo_original>
